<compile_context>
chip_gen: v7x
topology: tpu7x:2x2x1
jax: 0.10.0
libtpu: 0.0.40
codegen_flags: <defaults>
</compile_context>

<pallas_src>
import numpy as np
import jax
import jax.numpy as jnp
from jax.experimental import pallas as pl
from jax.experimental.pallas import tpu as pltpu


def up_guide_kernel(mix_ref, x_ref, kt_ref, o_ref):
    # mix_ref: (N*C, N*C)   VMEM  block-diag kron(I_N, Wconv)  (channel mix)
    # x_ref  : (N*C, H*W)   VMEM  flattened input (same block every grid step)
    # kt_ref : (H*W, TN)    VMEM  column tile of fused bilinear interp matrix
    # o_ref  : (N*C, TN)    VMEM  lane-dense output tile
    #
    # Channel mix first (K = N*C is tiny, result only H*W lanes wide), then
    # the fused bilinear x2 upsample as a 256-deep, lane-dense MXU matmul.
    xm = jnp.dot(mix_ref[...], x_ref[...], preferred_element_type=jnp.float32)
    o_ref[...] = jnp.dot(xm, kt_ref[...],
                         preferred_element_type=jnp.float32).astype(o_ref.dtype)


def bilinear_matrix_align_corners(n_in, scale=2):
    """Row-stochastic matrix M (n_out, n_in) s.t. out = M @ in reproduces
    torch.nn.Upsample(scale_factor=scale, mode='bilinear', align_corners=True)
    along one spatial axis."""
    n_out = n_in * scale
    M = np.zeros((n_out, n_in), dtype=np.float32)
    if n_in == 1:
        M[:, 0] = 1.0
        return M
    src = np.arange(n_out, dtype=np.float64) * (n_in - 1) / (n_out - 1)
    i0 = np.clip(np.floor(src).astype(np.int64), 0, n_in - 1)
    i1 = np.minimum(i0 + 1, n_in - 1)
    frac = (src - i0).astype(np.float32)
    rows = np.arange(n_out)
    np.add.at(M, (rows, i0), 1.0 - frac)
    np.add.at(M, (rows, i1), frac)
    return M


def up_guide(x, wconv, *, col_tile=512):
    """x: (N, C, H, W); wconv: (C, C) 1x1 conv weight (out, in)."""
    N, C, H, W = x.shape
    Ho, Wo = 2 * H, 2 * W
    HW, HoWo = H * W, Ho * Wo
    NC = N * C

    # Host-precomputed fused interpolation matrix:
    #   kron(Wh, Ww)[ho*Wo+wo, h*W+w] = Wh[ho, h] * Ww[wo, w]
    wh = bilinear_matrix_align_corners(H, 2)                  # (Ho, H)
    ww = bilinear_matrix_align_corners(W, 2)                  # (Wo, W)
    kt = jnp.asarray(np.kron(wh, ww).T)                       # (H*W, Ho*Wo) f32

    # Block-diagonal channel-mix matrix: kron(I_N, Wconv) -> (N*C, N*C).
    mix = jnp.asarray(
        np.kron(np.eye(N, dtype=np.float32), np.asarray(wconv, np.float32)))

    x2d = x.reshape(NC, HW)                                   # free view in HBM

    # Lane-dense column tiling of the output / kt (parallel across TCs).
    TN = col_tile if (HoWo > col_tile and HoWo % col_tile == 0) else HoWo
    grid = (HoWo // TN,)

    flops = 2 * NC * NC * HW + 2 * NC * HW * HoWo
    bytes_accessed = 4 * (kt.size + x2d.size + mix.size + NC * HoWo)
    # Double-buffered kt + out tiles, resident x2d + mix, plus headroom.
    vmem_need = 4 * (2 * HW * TN + 2 * NC * TN + NC * HW + NC * NC)
    vmem_limit = max(4 << 20, 2 * vmem_need)

    out2d = pl.pallas_call(
        up_guide_kernel,
        out_shape=jax.ShapeDtypeStruct((NC, HoWo), x.dtype),
        grid=grid,
        in_specs=[
            pl.BlockSpec((NC, NC), lambda j: (0, 0)),    # mix  (resident)
            pl.BlockSpec((NC, HW), lambda j: (0, 0)),    # x2d  (resident)
            pl.BlockSpec((HW, TN), lambda j: (0, j)),    # kt column tile
        ],
        out_specs=pl.BlockSpec((NC, TN), lambda j: (0, j)),
        compiler_params=pltpu.CompilerParams(
            dimension_semantics=("parallel",),
            vmem_limit_bytes=int(vmem_limit),
        ),
        cost_estimate=pl.CostEstimate(
            flops=int(flops), transcendentals=0,
            bytes_accessed=int(bytes_accessed)),
    )(mix, x2d, kt)
    return out2d.reshape(N, C, Ho, Wo)                        # free in HBM


def reference_numpy(x, wconv):
    """Gather-based NumPy reference: bilinear x2 (align_corners=True) + 1x1 conv."""
    x = np.asarray(x, dtype=np.float64)
    N, C, H, W = x.shape
    Ho, Wo = 2 * H, 2 * W

    def coords(n_in, n_out):
        if n_in == 1:
            return (np.zeros(n_out, np.int64), np.zeros(n_out, np.int64),
                    np.zeros(n_out))
        s = np.arange(n_out) * (n_in - 1) / (n_out - 1)
        lo = np.clip(np.floor(s).astype(np.int64), 0, n_in - 1)
        hi = np.minimum(lo + 1, n_in - 1)
        return lo, hi, s - lo

    h0, h1, fh = coords(H, Ho)
    w0, w1, fw = coords(W, Wo)
    fh = fh[None, None, :, None]
    fw = fw[None, None, None, :]
    up = ((1 - fh) * (1 - fw) * x[:, :, h0][:, :, :, w0]
          + (1 - fh) * fw * x[:, :, h0][:, :, :, w1]
          + fh * (1 - fw) * x[:, :, h1][:, :, :, w0]
          + fh * fw * x[:, :, h1][:, :, :, w1])
    return np.einsum('oc,nchw->nohw', np.asarray(wconv, dtype=np.float64), up)


if __name__ == "__main__":
    N, C, H, W = 2, 3, 16, 16          # ch=3 matches Up_guide default
    key = jax.random.PRNGKey(0)
    kx, kw = jax.random.split(key)
    x = jax.random.normal(kx, (N, C, H, W), dtype=jnp.float32)

    # Conv2d(ch, ch, 1, bias=False) weight: (C_out, C_in, 1, 1) -> (C, C)
    wconv = (jax.random.normal(kw, (C, C, 1, 1), dtype=jnp.float32) * 0.1)[:, :, 0, 0]

    out = up_guide(x, wconv)
    out = jax.block_until_ready(out)

    ref = reference_numpy(np.asarray(x), np.asarray(wconv))
    np.testing.assert_allclose(np.asarray(out), ref, rtol=1e-4, atol=1e-4)
    print("KERNEL_OK")
</pallas_src>

<mosaic_0001>
module attributes {stable_mosaic.version = 11 : i64} {
  func.func @up_guide_kernel(%arg0: i32, %arg1: memref<6x6xf32, #tpu.memory_space<vmem>>, %arg2: memref<6x256xf32, #tpu.memory_space<vmem>>, %arg3: memref<256x512xf32, #tpu.memory_space<vmem>>, %arg4: memref<6x512xf32, #tpu.memory_space<vmem>>) attributes {dimension_semantics = [#tpu.dimension_semantics<parallel>], iteration_bounds = array<i64: 2>, scalar_prefetch = 0 : i64, scratch_operands = 0 : i64, tpu.core_type = #tpu.core_type<tc>, window_params = [{pipeline_mode = #tpu.pipeline_mode<synchronous>, transform_indices = @transform_0, window_bounds = array<i64: 6, 6>}, {pipeline_mode = #tpu.pipeline_mode<synchronous>, transform_indices = @transform_1, window_bounds = array<i64: 6, 256>}, {transform_indices = @transform_2, window_bounds = array<i64: 256, 512>}, {transform_indices = @transform_3, window_bounds = array<i64: 6, 512>}]} {
    %c0 = arith.constant 0 : index
    %c0_0 = arith.constant 0 : index
    %0 = vector.load %arg1[%c0, %c0_0] : memref<6x6xf32, #tpu.memory_space<vmem>>, vector<6x6xf32>
    %c0_1 = arith.constant 0 : index
    %c0_2 = arith.constant 0 : index
    %1 = vector.load %arg2[%c0_1, %c0_2] : memref<6x256xf32, #tpu.memory_space<vmem>>, vector<6x256xf32>
    %cst = arith.constant dense<0.000000e+00> : vector<6x256xf32>
    %2 = tpu.matmul %0, %1, %cst {dimension_numbers = #tpu.dot_dimension_numbers<[1], [0], [0], [1], [0, 0, 1, 1], [], []>} : vector<6x6xf32>, vector<6x256xf32>, vector<6x256xf32> -> vector<6x256xf32>
    %c0_3 = arith.constant 0 : index
    %c0_4 = arith.constant 0 : index
    %3 = vector.load %arg3[%c0_3, %c0_4] : memref<256x512xf32, #tpu.memory_space<vmem>>, vector<256x512xf32>
    %cst_5 = arith.constant dense<0.000000e+00> : vector<6x512xf32>
    %4 = tpu.matmul %2, %3, %cst_5 {dimension_numbers = #tpu.dot_dimension_numbers<[1], [0], [0], [1], [0, 0, 1, 1], [], []>} : vector<6x256xf32>, vector<256x512xf32>, vector<6x512xf32> -> vector<6x512xf32>
    %c0_6 = arith.constant 0 : index
    %c0_7 = arith.constant 0 : index
    %5 = vector.load %arg4[%c0_6, %c0_7] : memref<6x512xf32, #tpu.memory_space<vmem>>, vector<6x512xf32>
    tpu.vector_store %arg4[%c0_6, %c0_7], %4 {strides = array<i32>} : memref<6x512xf32, #tpu.memory_space<vmem>>, vector<6x512xf32>,
    return
  }
  func.func @transform_0(%arg0: i32) -> (i32, i32) {
    %c0_i32 = arith.constant 0 : i32
    %c0_i32_0 = arith.constant 0 : i32
    %c0_i32_1 = arith.constant 0 : i32
    return %c0_i32, %c0_i32_0 : i32, i32
  }
  func.func @transform_1(%arg0: i32) -> (i32, i32) {
    %c0_i32 = arith.constant 0 : i32
    %c0_i32_0 = arith.constant 0 : i32
    %c0_i32_1 = arith.constant 0 : i32
    return %c0_i32, %c0_i32_0 : i32, i32
  }
  func.func @transform_2(%arg0: i32) -> (i32, i32) {
    %c0_i32 = arith.constant 0 : i32
    %c0_i32_0 = arith.constant 0 : i32
    return %c0_i32, %arg0 : i32, i32
  }
  func.func @transform_3(%arg0: i32) -> (i32, i32) {
    %c0_i32 = arith.constant 0 : i32
    %c0_i32_0 = arith.constant 0 : i32
    return %c0_i32, %arg0 : i32, i32
  }
}

</mosaic_0001>

<llo_original>
// kernel: tpu_custom_call.1
$region0: #{tpu_custom_call.1}
  #allocation0 [shape = 'u32[]', space=smem, size = 0x4, offset = 0x4, fixed_abs, tag = 'smem constant byte address 0x4 - core index']
  #allocation1 [shape = 'u32[144,128]{1,0:T(1,128)}', space=vmem, size = 0x12000, scoped, tag = 'internal scratch']
  %s0 = inlined_call_operand.hbm [shape: f32[6,6], index: 0, kind: input, shape index: {}]
  %s1 = inlined_call_operand.hbm [shape: f32[6,256], index: 1, kind: input, shape index: {}]
  %s2 = inlined_call_operand.hbm [shape: f32[256,1024], index: 2, kind: input, shape index: {}]
  %s3 = inlined_call_operand.hbm [shape: f32[6,1024], index: 3, kind: output, shape index: {}]
  %s4 = sld [smem:[#allocation0]]
  $region57: #{tpu_custom_call.1} parent=0
    _
  %s6 = ssub.s32 1, %s4
  %s7 = scalar_select 0, %s6, %s4
  $region1: #{tpu_custom_call.1} parent=0
    #allocation2 [shape = 'u8[4096]{0}', space=vmem, size = 0x1000, scoped, tag = 'input window, operand 0, single buffered']
    #allocation3 [shape = 's32[2]{0}', space=sflag, size = 0x8, scoped, tag = 'scoped memory for tpu_custom_call.1']
    #allocation4 [shape = 's32[2]{0}', space=sflag, size = 0x8, scoped, tag = 'scoped memory for tpu_custom_call.1']
    #allocation5 [shape = 'u8[8192]{0}', space=vmem, size = 0x2000, scoped, tag = 'input window, operand 1, single buffered']
    #allocation6 [shape = 's32[1]{0}', space=sflag, size = 0x4, scoped, tag = 'scoped memory for tpu_custom_call.1']
    #allocation7 [shape = 'u8[1048576]{0}', space=vmem, size = 0x100000, scoped, tag = 'input window, operand 2']
    #allocation8 [shape = 'u8[32768]{0}', space=vmem, size = 0x8000, scoped, tag = 'output window, operand 0']
    %8 = vsyncpa [#allocation3], 0
    %9 = vsyncpa [#allocation6], 0
    %10 = vsyncpa [#allocation4], 0
    %s11 = scalar_lea.sflag [#allocation4], 1
    %12 = vsyncpa %s11, 0
    loop: start=0, step=1, limit=4
    $region2: #{tpu_custom_call.1} parent=1 // loop_pre_header
      _
    $region3: #{tpu_custom_call.1} parent=1 // loop_header
      %s14 = sphi 0, %s18
      %p15 = scmp.ge.s32.totalorder %s14, 4
      %s22 = sphi 0, %s22
      %s24 = sphi 0, %s22
      %s25 = sphi 0, %s24
      %s39 = sphi 0, %s25
      %s43 = sphi 0, %s43
      %s45 = sphi 0, %s43
      %s46 = sphi 0, %s45
      %s60 = sphi 0, %s46
      %s66 = sphi 0, %s68
      %s69 = sphi 0, %s66
      %s70 = sphi 0, %s69
      %s86 = sphi 0, %s70
      %s92 = sphi 0, %s94
      %s95 = sphi 0, %s92
      %s96 = sphi 0, %s95
      %s112 = sphi 0, %s96
    $region4: #{tpu_custom_call.1} parent=1 // loop_header_branch
      %17 = sbr.rel (%p15) target = $region8
    $region5: #{tpu_custom_call.1} parent=1 // loop_body
      %s19 = ssub.s32 %s14, 1
      %s20 = ssub.s32 %s14, 2
      %s21 = sadd.s32 %s14, 1
      %s23 = sadd.s32 %s22, 1
      %p26 = scmp.eq.s32.totalorder %s14, 1
      %p27 = scmp.ne.s32.totalorder %s22, %s24
      %p28 = scmp.eq.s32.totalorder %s14, 0
      %p29 = por %p27, %p28
      %p30 = scmp.ne.s32.totalorder %s22, %s24
      %p31 = scmp.eq.s32.totalorder %s19, 1
      %p32 = por %p30, %p31
      %p33 = scmp.ne.s32.totalorder %s24, %s25
      %p34 = scmp.eq.s32.totalorder %s19, 0
      %p35 = por %p33, %p34
      %p36 = scmp.ne.s32.totalorder %s24, %s25
      %p37 = scmp.eq.s32.totalorder %s20, 1
      %p38 = por %p36, %p37
      %p40 = scmp.ne.s32.totalorder %s25, %s39
      %p41 = scmp.eq.s32.totalorder %s20, 0
      %p42 = por %p40, %p41
      %s44 = sadd.s32 %s43, 1
      %p47 = scmp.eq.s32.totalorder %s14, 1
      %p48 = scmp.ne.s32.totalorder %s43, %s45
      %p49 = scmp.eq.s32.totalorder %s14, 0
      %p50 = por %p48, %p49
      %p51 = scmp.ne.s32.totalorder %s43, %s45
      %p52 = scmp.eq.s32.totalorder %s19, 1
      %p53 = por %p51, %p52
      %p54 = scmp.ne.s32.totalorder %s45, %s46
      %p55 = scmp.eq.s32.totalorder %s19, 0
      %p56 = por %p54, %p55
      %p57 = scmp.ne.s32.totalorder %s45, %s46
      %p58 = scmp.eq.s32.totalorder %s20, 1
      %p59 = por %p57, %p58
      %p61 = scmp.ne.s32.totalorder %s46, %s60
      %p62 = scmp.eq.s32.totalorder %s20, 0
      %p63 = por %p61, %p62
      %s64 = ssub.s32 %s14, %s21
      %p65 = scmp.eq.s32.totalorder %s64, 0
      %s67 = sadd.s32 %s66, 1
      %s68 = scalar_select %p65, %s66, %s67
      %p71 = pneg %p65
      %p72 = scmp.eq.s32.totalorder %s14, 1
      %p73 = por %p71, %p72
      %p74 = scmp.ne.s32.totalorder %s66, %s69
      %p75 = scmp.eq.s32.totalorder %s14, 0
      %p76 = por %p74, %p75
      %p77 = scmp.ne.s32.totalorder %s66, %s69
      %p78 = scmp.eq.s32.totalorder %s19, 1
      %p79 = por %p77, %p78
      %p80 = scmp.ne.s32.totalorder %s69, %s70
      %p81 = scmp.eq.s32.totalorder %s19, 0
      %p82 = por %p80, %p81
      %p83 = scmp.ne.s32.totalorder %s69, %s70
      %p84 = scmp.eq.s32.totalorder %s20, 1
      %p85 = por %p83, %p84
      %p87 = scmp.ne.s32.totalorder %s70, %s86
      %p88 = scmp.eq.s32.totalorder %s20, 0
      %p89 = por %p87, %p88
      %s90 = ssub.s32 %s14, %s21
      %p91 = scmp.eq.s32.totalorder %s90, 0
      %s93 = sadd.s32 %s92, 1
      %s94 = scalar_select %p91, %s92, %s93
      %p97 = pneg %p91
      %p98 = scmp.eq.s32.totalorder %s14, 1
      %p99 = por %p97, %p98
      %p100 = scmp.ne.s32.totalorder %s92, %s95
      %p101 = scmp.eq.s32.totalorder %s14, 0
      %p102 = por %p100, %p101
      %p103 = scmp.ne.s32.totalorder %s92, %s95
      %p104 = scmp.eq.s32.totalorder %s19, 1
      %p105 = por %p103, %p104
      %p106 = scmp.ne.s32.totalorder %s95, %s96
      %p107 = scmp.eq.s32.totalorder %s19, 0
      %p108 = por %p106, %p107
      %p109 = scmp.ne.s32.totalorder %s95, %s96
      %p110 = scmp.eq.s32.totalorder %s20, 1
      %p111 = por %p109, %p110
      %p113 = scmp.ne.s32.totalorder %s96, %s112
      %p114 = scmp.eq.s32.totalorder %s20, 0
      %p115 = por %p113, %p114
      %p116 = scmp.le.s32.totalorder 1, %s14
      %p117 = scmp.lt.s32.totalorder %s14, 3
      %p118 = pnand %p116, %p117
      %p119 = pneg %p118
      // Predicated region
      $region9: #{tpu_custom_call.1} parent=5 // pred_check
        _
      $region10: #{tpu_custom_call.1} parent=5 // pred_check_branch
        %121 = sbr.rel (%p118) target = $region12
      $region11: #{tpu_custom_call.1} parent=5 // pred_region
        %s122 = ssub.s32 %s14, 1
        // Predicated region
        $region13: #{tpu_custom_call.1} parent=11 // pred_check
          %p123 = pneg %p35
        $region14: #{tpu_custom_call.1} parent=11 // pred_check_branch
          %125 = sbr.rel (%p123) target = $region16
        $region15: #{tpu_custom_call.1} parent=11 // pred_region
          %s127 = ssub.s32 128, 128
          %128 = vsyncadd [#allocation3], %s127
          %s130 = sshll.u32 [#allocation2], 4
          %s131 = int_to_ptr.vmem [resolvable:$true] %s130
          %133 = dma.hbm_to_vmem [thread:$0]  %s0, 128, %s131, [#allocation3]
        $region16: #{tpu_custom_call.1} parent=11 // pred_fallthru
          _
        // Predicated region
        $region17: #{tpu_custom_call.1} parent=11 // pred_check
          %p134 = pneg %p56
        $region18: #{tpu_custom_call.1} parent=11 // pred_check_branch
          %136 = sbr.rel (%p134) target = $region20
        $region19: #{tpu_custom_call.1} parent=11 // pred_region
          %s138 = ssub.s32 256, 256
          %139 = vsyncadd [#allocation6], %s138
          %s141 = sshll.u32 [#allocation5], 4
          %s142 = int_to_ptr.vmem [resolvable:$true] %s141
          %144 = dma.hbm_to_vmem [thread:$0]  %s1, 256, %s142, [#allocation6]
        $region20: #{tpu_custom_call.1} parent=11 // pred_fallthru
          _
      $region12: #{tpu_custom_call.1} parent=5 // pred_fallthru
        _
      %p145 = scmp.lt.s32.totalorder %s14, 2
      // Predicated region
      $region21: #{tpu_custom_call.1} parent=5 // pred_check
        %p146 = pneg %p145
      $region22: #{tpu_custom_call.1} parent=5 // pred_check_branch
        %148 = sbr.rel (%p146) target = $region24
      $region23: #{tpu_custom_call.1} parent=5 // pred_region
        // Predicated region
        $region25: #{tpu_custom_call.1} parent=23 // pred_check
          %p149 = pneg %p76
        $region26: #{tpu_custom_call.1} parent=23 // pred_check_branch
          %151 = sbr.rel (%p149) target = $region28
        $region27: #{tpu_custom_call.1} parent=23 // pred_region
          %s152 = sand.u32 %s14, 1
          %s153 = scalar_lea.sflag [#allocation3], %s152
          %s154 = sand.u32 %s66, 1
          %s155 = smul.addr %s154, 1024
          %s156 = scalar_lea.vmem [#allocation7], %s155
          %s157 = smul.u32 4, %s14
          %s159 = ssub.s32 16384, 16384
          %160 = vsyncadd %s153, %s159
          %s161 = smul.addr %s157, 128
          %s162 = scalar_lea.hbm %s2, %s161
          %s163 = sshll.u32 %s156, 4
          %s164 = int_to_ptr.vmem [resolvable:$true] %s163
          %169 = dma.hbm_to_vmem [thread:$0]  %s162, 16384, %s164, %s153, 1024, 512, 32
        $region28: #{tpu_custom_call.1} parent=23 // pred_fallthru
          _
      $region24: #{tpu_custom_call.1} parent=5 // pred_fallthru
        _
      %p170 = scmp.le.s32.totalorder 1, %s14
      %p171 = scmp.lt.s32.totalorder %s14, 3
      %p172 = pnand %p170, %p171
      %p173 = pneg %p172
      // Predicated region
      $region29: #{tpu_custom_call.1} parent=5 // pred_check
        _
      $region30: #{tpu_custom_call.1} parent=5 // pred_check_branch
        %175 = sbr.rel (%p172) target = $region32
      $region31: #{tpu_custom_call.1} parent=5 // pred_region
        %s176 = ssub.s32 %s14, 1
        // Predicated region
        $region33: #{tpu_custom_call.1} parent=31 // pred_check
          %p177 = pneg %p35
        $region34: #{tpu_custom_call.1} parent=31 // pred_check_branch
          %179 = sbr.rel (%p177) target = $region36
        $region35: #{tpu_custom_call.1} parent=31 // pred_region
          %180 = dma.done [#allocation3], 128
        $region36: #{tpu_custom_call.1} parent=31 // pred_fallthru
          _
        // Predicated region
        $region37: #{tpu_custom_call.1} parent=31 // pred_check
          %p181 = pneg %p56
        $region38: #{tpu_custom_call.1} parent=31 // pred_check_branch
          %183 = sbr.rel (%p181) target = $region40
        $region39: #{tpu_custom_call.1} parent=31 // pred_region
          %184 = dma.done [#allocation6], 256
        $region40: #{tpu_custom_call.1} parent=31 // pred_fallthru
          _
        %s185 = sand.u32 %s19, 1
        %s186 = scalar_lea.sflag [#allocation3], %s185
        %s187 = sand.u32 %s69, 1
        %s188 = smul.addr %s187, 1024
        %s189 = scalar_lea.vmem [#allocation7], %s188
        // Predicated region
        $region41: #{tpu_custom_call.1} parent=31 // pred_check
          %p190 = pneg %p82
        $region42: #{tpu_custom_call.1} parent=31 // pred_check_branch
          %192 = sbr.rel (%p190) target = $region44
        $region43: #{tpu_custom_call.1} parent=31 // pred_region
          %193 = dma.done %s186, 16384
        $region44: #{tpu_custom_call.1} parent=31 // pred_fallthru
          _
        %p194 = pneg %p35
        %p195 = pneg %p32
        %p196 = pneg %p56
        %p197 = pneg %p53
        %s198 = sand.u32 %s19, 1
        %s199 = scalar_lea.sflag [#allocation3], %s198
        %s200 = sand.u32 %s69, 1
        %s201 = smul.addr %s200, 1024
        %s202 = scalar_lea.vmem [#allocation7], %s201
        %p203 = pneg %p82
        %p204 = pneg %p79
        %p205 = pneg %p108
        %p206 = pneg %p105
        %s207 = sand.u32 %s95, 1
        %s208 = scalar_lea.sflag [#allocation4], %s207
        %s209 = sand.u32 %s95, 1
        %s210 = smul.addr %s209, 32
        %s211 = scalar_lea.vmem [#allocation8], %s210
        %s212 = smul.u32 4, %s19
        %s213 = smul.u32 4, %s19
        %v214 = vld [vmem:[#allocation2] sm:$0x3f]
        %v215 = vld [vmem:[#allocation5] sm:$0x3f]
        %v216 = vld [vmem:[#allocation5 + $0x8] sm:$0x3f]
        %vm217 = vcmask 48128
        %v219 = vsel %vm217, %v214, 0
        %vm221 = vcmask 1045504
        %v223 = vsel %vm221, %v215, 0
        %v226 = vsel %vm221, %v216, 0
        %228 = vmatprep.subr.mxu0 %v226
        %229 = vmatpush1.msra.mxu0 %v223
        %230 = vmatprep.subr.mxu0 0.0
        %231 = vmatpush1.msra.mxu0 0.0
        %232 = vmatprep.subr.mxu0 0.0
        %233 = vmatpush1.msra.mxu0 0.0
        %234 = vmatprep.subr.mxu0 0.0
        %235 = vmatpush1.msra.mxu0 0.0
        %236 = vmatprep.subr.mxu0 0.0
        %237 = vmatpush1.msra.mxu0 0.0
        %238 = vmatprep.subr.mxu0 0.0
        %239 = vmatpush1.msra.mxu0 0.0
        %240 = vmatprep.subr.mxu0 0.0
        %241 = vmatpush1.msra.mxu0 0.0
        %242 = vmatprep.subr.mxu0 0.0
        %243 = vmatpush1.msra.mxu0 0.0
        %244 = vmatprep.subr.mxu0 0.0
        %245 = vmatpush1.msra.mxu0 0.0
        %246 = vmatprep.subr.mxu0 0.0
        %247 = vmatpush1.msra.mxu0 0.0
        %248 = vmatprep.subr.mxu0 0.0
        %249 = vmatpush1.msra.mxu0 0.0
        %250 = vmatprep.subr.mxu0 0.0
        %251 = vmatpush1.msra.mxu0 0.0
        %252 = vmatprep.subr.mxu0 0.0
        %253 = vmatpush1.msra.mxu0 0.0
        %254 = vmatprep.subr.mxu0 0.0
        %255 = vmatpush1.msra.mxu0 0.0
        %256 = vmatprep.subr.mxu0 0.0
        %257 = vmatpush1.msra.mxu0 0.0
        %258 = vmatprep.subr.mxu0 0.0
        %259 = vmatpush1.msra.mxu0 0.0
        %260 = vmatprep.subr.mxu0 0.0
        %261 = vmatpush1.msra.mxu0 0.0
        %262 = vmatprep.subr.mxu0 0.0
        %263 = vmatpush1.msra.mxu0 0.0
        %264 = vmatprep.subr.mxu0 0.0
        %265 = vmatpush1.msra.mxu0 0.0
        %266 = vmatprep.subr.mxu0 0.0
        %267 = vmatpush1.msra.mxu0 0.0
        %268 = vmatprep.subr.mxu0 0.0
        %269 = vmatpush1.msra.mxu0 0.0
        %270 = vmatprep.subr.mxu0 0.0
        %271 = vmatpush1.msra.mxu0 0.0
        %272 = vmatprep.subr.mxu0 0.0
        %273 = vmatpush1.msra.mxu0 0.0
        %274 = vmatprep.subr.mxu0 0.0
        %275 = vmatpush1.msra.mxu0 0.0
        %276 = vmatprep.subr.mxu0 0.0
        %277 = vmatpush1.msra.mxu0 0.0
        %278 = vmatprep.subr.mxu0 0.0
        %279 = vmatpush1.msra.mxu0 0.0
        %280 = vmatprep.subr.mxu0 0.0
        %281 = vmatpush1.msra.mxu0 0.0
        %282 = vmatprep.subr.mxu0 0.0
        %283 = vmatpush1.msra.mxu0 0.0
        %284 = vmatprep.subr.mxu0 0.0
        %285 = vmatpush1.msra.mxu0 0.0
        %286 = vmatprep.subr.mxu0 0.0
        %287 = vmatpush1.msra.mxu0 0.0
        %288 = vmatprep.subr.mxu0 0.0
        %289 = vmatpush1.msra.mxu0 0.0
        %290 = vmatprep.subr.mxu0 0.0
        %291 = vmatpush1.msra.mxu0 0.0
        %292 = vmatprep.mubr.f32.mxu0 0.0
        %293 = vmatmul.mubr.f32.gmra.mrb[0].mxu0 %v219
        %v294 = vpop.f32.mrb[0].mxu0
        %v295 = vadd.f32 0.0, %v294
        %v296 = vpop.f32.mrb[0].mxu0
        %v297 = vadd.f32 0.0, %v296
        %298 = vdwg.mxu0
        %v299 = vld [vmem:[%s189] sm:$0xff]
        %v300 = vld [vmem:[%s189 + $0x8] sm:$0xff]
        %v301 = vld [vmem:[%s189 + $0x10] sm:$0xff]
        %v302 = vld [vmem:[%s189 + $0x18] sm:$0xff]
        %v303 = vld [vmem:[%s189 + $0x20] sm:$0xff]
        %v304 = vld [vmem:[%s189 + $0x28] sm:$0xff]
        %v305 = vld [vmem:[%s189 + $0x30] sm:$0xff]
        %v306 = vld [vmem:[%s189 + $0x38] sm:$0xff]
        %v307 = vld [vmem:[%s189 + $0x40] sm:$0xff]
        %v308 = vld [vmem:[%s189 + $0x48] sm:$0xff]
        %v309 = vld [vmem:[%s189 + $0x50] sm:$0xff]
        %v310 = vld [vmem:[%s189 + $0x58] sm:$0xff]
        %v311 = vld [vmem:[%s189 + $0x60] sm:$0xff]
        %v312 = vld [vmem:[%s189 + $0x68] sm:$0xff]
        %v313 = vld [vmem:[%s189 + $0x70] sm:$0xff]
        %v314 = vld [vmem:[%s189 + $0x78] sm:$0xff]
        %v315 = vld [vmem:[%s189 + $0x80] sm:$0xff]
        %v316 = vld [vmem:[%s189 + $0x88] sm:$0xff]
        %v317 = vld [vmem:[%s189 + $0x90] sm:$0xff]
        %v318 = vld [vmem:[%s189 + $0x98] sm:$0xff]
        %v319 = vld [vmem:[%s189 + $0xa0] sm:$0xff]
        %v320 = vld [vmem:[%s189 + $0xa8] sm:$0xff]
        %v321 = vld [vmem:[%s189 + $0xb0] sm:$0xff]
        %v322 = vld [vmem:[%s189 + $0xb8] sm:$0xff]
        %v323 = vld [vmem:[%s189 + $0xc0] sm:$0xff]
        %v324 = vld [vmem:[%s189 + $0xc8] sm:$0xff]
        %v325 = vld [vmem:[%s189 + $0xd0] sm:$0xff]
        %v326 = vld [vmem:[%s189 + $0xd8] sm:$0xff]
        %v327 = vld [vmem:[%s189 + $0xe0] sm:$0xff]
        %v328 = vld [vmem:[%s189 + $0xe8] sm:$0xff]
        %v329 = vld [vmem:[%s189 + $0xf0] sm:$0xff]
        %v330 = vld [vmem:[%s189 + $0xf8] sm:$0xff]
        %v331 = vld [vmem:[%s189 + $0x100] sm:$0xff]
        %v332 = vld [vmem:[%s189 + $0x108] sm:$0xff]
        %v333 = vld [vmem:[%s189 + $0x110] sm:$0xff]
        %v334 = vld [vmem:[%s189 + $0x118] sm:$0xff]
        %v335 = vld [vmem:[%s189 + $0x120] sm:$0xff]
        %v336 = vld [vmem:[%s189 + $0x128] sm:$0xff]
        %v337 = vld [vmem:[%s189 + $0x130] sm:$0xff]
        %v338 = vld [vmem:[%s189 + $0x138] sm:$0xff]
        %v339 = vld [vmem:[%s189 + $0x140] sm:$0xff]
        %v340 = vld [vmem:[%s189 + $0x148] sm:$0xff]
        %v341 = vld [vmem:[%s189 + $0x150] sm:$0xff]
        %v342 = vld [vmem:[%s189 + $0x158] sm:$0xff]
        %v343 = vld [vmem:[%s189 + $0x160] sm:$0xff]
        %v344 = vld [vmem:[%s189 + $0x168] sm:$0xff]
        %v345 = vld [vmem:[%s189 + $0x170] sm:$0xff]
        %v346 = vld [vmem:[%s189 + $0x178] sm:$0xff]
        %v347 = vld [vmem:[%s189 + $0x180] sm:$0xff]
        %v348 = vld [vmem:[%s189 + $0x188] sm:$0xff]
        %v349 = vld [vmem:[%s189 + $0x190] sm:$0xff]
        %v350 = vld [vmem:[%s189 + $0x198] sm:$0xff]
        %v351 = vld [vmem:[%s189 + $0x1a0] sm:$0xff]
        %v352 = vld [vmem:[%s189 + $0x1a8] sm:$0xff]
        %v353 = vld [vmem:[%s189 + $0x1b0] sm:$0xff]
        %v354 = vld [vmem:[%s189 + $0x1b8] sm:$0xff]
        %v355 = vld [vmem:[%s189 + $0x1c0] sm:$0xff]
        %v356 = vld [vmem:[%s189 + $0x1c8] sm:$0xff]
        %v357 = vld [vmem:[%s189 + $0x1d0] sm:$0xff]
        %v358 = vld [vmem:[%s189 + $0x1d8] sm:$0xff]
        %v359 = vld [vmem:[%s189 + $0x1e0] sm:$0xff]
        %v360 = vld [vmem:[%s189 + $0x1e8] sm:$0xff]
        %v361 = vld [vmem:[%s189 + $0x1f0] sm:$0xff]
        %v362 = vld [vmem:[%s189 + $0x1f8] sm:$0xff]
        %v363 = vld [vmem:[%s189 + $0x200] sm:$0xff]
        %v364 = vld [vmem:[%s189 + $0x208] sm:$0xff]
        %v365 = vld [vmem:[%s189 + $0x210] sm:$0xff]
        %v366 = vld [vmem:[%s189 + $0x218] sm:$0xff]
        %v367 = vld [vmem:[%s189 + $0x220] sm:$0xff]
        %v368 = vld [vmem:[%s189 + $0x228] sm:$0xff]
        %v369 = vld [vmem:[%s189 + $0x230] sm:$0xff]
        %v370 = vld [vmem:[%s189 + $0x238] sm:$0xff]
        %v371 = vld [vmem:[%s189 + $0x240] sm:$0xff]
        %v372 = vld [vmem:[%s189 + $0x248] sm:$0xff]
        %v373 = vld [vmem:[%s189 + $0x250] sm:$0xff]
        %v374 = vld [vmem:[%s189 + $0x258] sm:$0xff]
        %v375 = vld [vmem:[%s189 + $0x260] sm:$0xff]
        %v376 = vld [vmem:[%s189 + $0x268] sm:$0xff]
        %v377 = vld [vmem:[%s189 + $0x270] sm:$0xff]
        %v378 = vld [vmem:[%s189 + $0x278] sm:$0xff]
        %v379 = vld [vmem:[%s189 + $0x280] sm:$0xff]
        %v380 = vld [vmem:[%s189 + $0x288] sm:$0xff]
        %v381 = vld [vmem:[%s189 + $0x290] sm:$0xff]
        %v382 = vld [vmem:[%s189 + $0x298] sm:$0xff]
        %v383 = vld [vmem:[%s189 + $0x2a0] sm:$0xff]
        %v384 = vld [vmem:[%s189 + $0x2a8] sm:$0xff]
        %v385 = vld [vmem:[%s189 + $0x2b0] sm:$0xff]
        %v386 = vld [vmem:[%s189 + $0x2b8] sm:$0xff]
        %v387 = vld [vmem:[%s189 + $0x2c0] sm:$0xff]
        %v388 = vld [vmem:[%s189 + $0x2c8] sm:$0xff]
        %v389 = vld [vmem:[%s189 + $0x2d0] sm:$0xff]
        %v390 = vld [vmem:[%s189 + $0x2d8] sm:$0xff]
        %v391 = vld [vmem:[%s189 + $0x2e0] sm:$0xff]
        %v392 = vld [vmem:[%s189 + $0x2e8] sm:$0xff]
        %v393 = vld [vmem:[%s189 + $0x2f0] sm:$0xff]
        %v394 = vld [vmem:[%s189 + $0x2f8] sm:$0xff]
        %v395 = vld [vmem:[%s189 + $0x300] sm:$0xff]
        %v396 = vld [vmem:[%s189 + $0x308] sm:$0xff]
        %v397 = vld [vmem:[%s189 + $0x310] sm:$0xff]
        %v398 = vld [vmem:[%s189 + $0x318] sm:$0xff]
        %v399 = vld [vmem:[%s189 + $0x320] sm:$0xff]
        %v400 = vld [vmem:[%s189 + $0x328] sm:$0xff]
        %v401 = vld [vmem:[%s189 + $0x330] sm:$0xff]
        %v402 = vld [vmem:[%s189 + $0x338] sm:$0xff]
        %v403 = vld [vmem:[%s189 + $0x340] sm:$0xff]
        %v404 = vld [vmem:[%s189 + $0x348] sm:$0xff]
        %v405 = vld [vmem:[%s189 + $0x350] sm:$0xff]
        %v406 = vld [vmem:[%s189 + $0x358] sm:$0xff]
        %v407 = vld [vmem:[%s189 + $0x360] sm:$0xff]
        %v408 = vld [vmem:[%s189 + $0x368] sm:$0xff]
        %v409 = vld [vmem:[%s189 + $0x370] sm:$0xff]
        %v410 = vld [vmem:[%s189 + $0x378] sm:$0xff]
        %v411 = vld [vmem:[%s189 + $0x380] sm:$0xff]
        %v412 = vld [vmem:[%s189 + $0x388] sm:$0xff]
        %v413 = vld [vmem:[%s189 + $0x390] sm:$0xff]
        %v414 = vld [vmem:[%s189 + $0x398] sm:$0xff]
        %v415 = vld [vmem:[%s189 + $0x3a0] sm:$0xff]
        %v416 = vld [vmem:[%s189 + $0x3a8] sm:$0xff]
        %v417 = vld [vmem:[%s189 + $0x3b0] sm:$0xff]
        %v418 = vld [vmem:[%s189 + $0x3b8] sm:$0xff]
        %v419 = vld [vmem:[%s189 + $0x3c0] sm:$0xff]
        %v420 = vld [vmem:[%s189 + $0x3c8] sm:$0xff]
        %v421 = vld [vmem:[%s189 + $0x3d0] sm:$0xff]
        %v422 = vld [vmem:[%s189 + $0x3d8] sm:$0xff]
        %v423 = vld [vmem:[%s189 + $0x3e0] sm:$0xff]
        %v424 = vld [vmem:[%s189 + $0x3e8] sm:$0xff]
        %v425 = vld [vmem:[%s189 + $0x3f0] sm:$0xff]
        %v426 = vld [vmem:[%s189 + $0x3f8] sm:$0xff]
        %427 = vmatprep.subr.mxu0 %v300
        %428 = vmatpush1.msra.mxu0 %v299
        %429 = vmatprep.subr.mxu0 %v304
        %430 = vmatpush1.msra.mxu0 %v303
        %431 = vmatprep.subr.mxu0 %v308
        %432 = vmatpush1.msra.mxu0 %v307
        %433 = vmatprep.subr.mxu0 %v312
        %434 = vmatpush1.msra.mxu0 %v311
        %435 = vmatprep.subr.mxu0 %v316
        %436 = vmatpush1.msra.mxu0 %v315
        %437 = vmatprep.subr.mxu0 %v320
        %438 = vmatpush1.msra.mxu0 %v319
        %439 = vmatprep.subr.mxu0 %v324
        %440 = vmatpush1.msra.mxu0 %v323
        %441 = vmatprep.subr.mxu0 %v328
        %442 = vmatpush1.msra.mxu0 %v327
        %443 = vmatprep.subr.mxu0 %v332
        %444 = vmatpush1.msra.mxu0 %v331
        %445 = vmatprep.subr.mxu0 %v336
        %446 = vmatpush1.msra.mxu0 %v335
        %447 = vmatprep.subr.mxu0 %v340
        %448 = vmatpush1.msra.mxu0 %v339
        %449 = vmatprep.subr.mxu0 %v344
        %450 = vmatpush1.msra.mxu0 %v343
        %451 = vmatprep.subr.mxu0 %v348
        %452 = vmatpush1.msra.mxu0 %v347
        %453 = vmatprep.subr.mxu0 %v352
        %454 = vmatpush1.msra.mxu0 %v351
        %455 = vmatprep.subr.mxu0 %v356
        %456 = vmatpush1.msra.mxu0 %v355
        %457 = vmatprep.subr.mxu0 %v360
        %458 = vmatpush1.msra.mxu0 %v359
        %459 = vmatprep.subr.mxu0 %v364
        %460 = vmatpush1.msra.mxu0 %v363
        %461 = vmatprep.subr.mxu0 %v368
        %462 = vmatpush1.msra.mxu0 %v367
        %463 = vmatprep.subr.mxu0 %v372
        %464 = vmatpush1.msra.mxu0 %v371
        %465 = vmatprep.subr.mxu0 %v376
        %466 = vmatpush1.msra.mxu0 %v375
        %467 = vmatprep.subr.mxu0 %v380
        %468 = vmatpush1.msra.mxu0 %v379
        %469 = vmatprep.subr.mxu0 %v384
        %470 = vmatpush1.msra.mxu0 %v383
        %471 = vmatprep.subr.mxu0 %v388
        %472 = vmatpush1.msra.mxu0 %v387
        %473 = vmatprep.subr.mxu0 %v392
        %474 = vmatpush1.msra.mxu0 %v391
        %475 = vmatprep.subr.mxu0 %v396
        %476 = vmatpush1.msra.mxu0 %v395
        %477 = vmatprep.subr.mxu0 %v400
        %478 = vmatpush1.msra.mxu0 %v399
        %479 = vmatprep.subr.mxu0 %v404
        %480 = vmatpush1.msra.mxu0 %v403
        %481 = vmatprep.subr.mxu0 %v408
        %482 = vmatpush1.msra.mxu0 %v407
        %483 = vmatprep.subr.mxu0 %v412
        %484 = vmatpush1.msra.mxu0 %v411
        %485 = vmatprep.subr.mxu0 %v416
        %486 = vmatpush1.msra.mxu0 %v415
        %487 = vmatprep.subr.mxu0 %v420
        %488 = vmatpush1.msra.mxu0 %v419
        %489 = vmatprep.subr.mxu0 %v424
        %490 = vmatpush1.msra.mxu0 %v423
        %491 = vmatprep.mubr.f32.mxu0 %v297
        %492 = vmatmul.mubr.f32.gmra.mrb[0].mxu0 %v295
        %v493 = vpop.f32.mrb[0].mxu0
        %v494 = vadd.f32 0.0, %v493
        %v495 = vpop.f32.mrb[0].mxu0
        %v496 = vadd.f32 0.0, %v495
        %497 = vdwg.mxu0
        %498 = vmatprep.subr.mxu0 %v302
        %499 = vmatpush1.msra.mxu0 %v301
        %500 = vmatprep.subr.mxu0 %v306
        %501 = vmatpush1.msra.mxu0 %v305
        %502 = vmatprep.subr.mxu0 %v310
        %503 = vmatpush1.msra.mxu0 %v309
        %504 = vmatprep.subr.mxu0 %v314
        %505 = vmatpush1.msra.mxu0 %v313
        %506 = vmatprep.subr.mxu0 %v318
        %507 = vmatpush1.msra.mxu0 %v317
        %508 = vmatprep.subr.mxu0 %v322
        %509 = vmatpush1.msra.mxu0 %v321
        %510 = vmatprep.subr.mxu0 %v326
        %511 = vmatpush1.msra.mxu0 %v325
        %512 = vmatprep.subr.mxu0 %v330
        %513 = vmatpush1.msra.mxu0 %v329
        %514 = vmatprep.subr.mxu0 %v334
        %515 = vmatpush1.msra.mxu0 %v333
        %516 = vmatprep.subr.mxu0 %v338
        %517 = vmatpush1.msra.mxu0 %v337
        %518 = vmatprep.subr.mxu0 %v342
        %519 = vmatpush1.msra.mxu0 %v341
        %520 = vmatprep.subr.mxu0 %v346
        %521 = vmatpush1.msra.mxu0 %v345
        %522 = vmatprep.subr.mxu0 %v350
        %523 = vmatpush1.msra.mxu0 %v349
        %524 = vmatprep.subr.mxu0 %v354
        %525 = vmatpush1.msra.mxu0 %v353
        %526 = vmatprep.subr.mxu0 %v358
        %527 = vmatpush1.msra.mxu0 %v357
        %528 = vmatprep.subr.mxu0 %v362
        %529 = vmatpush1.msra.mxu0 %v361
        %530 = vmatprep.subr.mxu0 %v366
        %531 = vmatpush1.msra.mxu0 %v365
        %532 = vmatprep.subr.mxu0 %v370
        %533 = vmatpush1.msra.mxu0 %v369
        %534 = vmatprep.subr.mxu0 %v374
        %535 = vmatpush1.msra.mxu0 %v373
        %536 = vmatprep.subr.mxu0 %v378
        %537 = vmatpush1.msra.mxu0 %v377
        %538 = vmatprep.subr.mxu0 %v382
        %539 = vmatpush1.msra.mxu0 %v381
        %540 = vmatprep.subr.mxu0 %v386
        %541 = vmatpush1.msra.mxu0 %v385
        %542 = vmatprep.subr.mxu0 %v390
        %543 = vmatpush1.msra.mxu0 %v389
        %544 = vmatprep.subr.mxu0 %v394
        %545 = vmatpush1.msra.mxu0 %v393
        %546 = vmatprep.subr.mxu0 %v398
        %547 = vmatpush1.msra.mxu0 %v397
        %548 = vmatprep.subr.mxu0 %v402
        %549 = vmatpush1.msra.mxu0 %v401
        %550 = vmatprep.subr.mxu0 %v406
        %551 = vmatpush1.msra.mxu0 %v405
        %552 = vmatprep.subr.mxu0 %v410
        %553 = vmatpush1.msra.mxu0 %v409
        %554 = vmatprep.subr.mxu0 %v414
        %555 = vmatpush1.msra.mxu0 %v413
        %556 = vmatprep.subr.mxu0 %v418
        %557 = vmatpush1.msra.mxu0 %v417
        %558 = vmatprep.subr.mxu0 %v422
        %559 = vmatpush1.msra.mxu0 %v421
        %560 = vmatprep.subr.mxu0 %v426
        %561 = vmatpush1.msra.mxu0 %v425
        %562 = vmatprep.mubr.f32.mxu0 %v297
        %563 = vmatmul.mubr.f32.gmra.mrb[0].mxu0 %v295
        %v564 = vpop.f32.mrb[0].mxu0
        %v565 = vadd.f32 0.0, %v564
        %v566 = vpop.f32.mrb[0].mxu0
        %v567 = vadd.f32 0.0, %v566
        %568 = vdwg.mxu0
        %569 = vst [vmem:[%s211] sm:$0x3f] %v494
        %570 = vst [vmem:[%s211 + $0x8] sm:$0x3f] %v496
        %571 = vst [vmem:[%s211 + $0x10] sm:$0x3f] %v565
        %572 = vst [vmem:[%s211 + $0x18] sm:$0x3f] %v567
        %s573 = sand.u32 %s95, 1
        %s574 = scalar_lea.sflag [#allocation4], %s573
        %s575 = sand.u32 %s95, 1
        %s576 = smul.addr %s575, 32
        %s577 = scalar_lea.vmem [#allocation8], %s576
        // Predicated region
        $region45: #{tpu_custom_call.1} parent=31 // pred_check
          %p578 = pneg %p105
        $region46: #{tpu_custom_call.1} parent=31 // pred_check_branch
          %580 = sbr.rel (%p578) target = $region48
        $region47: #{tpu_custom_call.1} parent=31 // pred_region
          %s581 = smul.u32 4, %s19
          %s583 = ssub.s32 512, 512
          %584 = vsyncadd %s574, %s583
          %s585 = smul.addr %s581, 128
          %s586 = scalar_lea.hbm %s3, %s585
          %s588 = sshll.u32 %s577, 4
          %s589 = int_to_ptr.vmem [resolvable:$true] %s588
          %591 = dma.vmem_to_hbm [thread:$0]  %s589, 512, %s586, %s574
        $region48: #{tpu_custom_call.1} parent=31 // pred_fallthru
          _
      $region32: #{tpu_custom_call.1} parent=5 // pred_fallthru
        _
      %p592 = scmp.le.s32.totalorder 2, %s14
      // Predicated region
      $region49: #{tpu_custom_call.1} parent=5 // pred_check
        %p593 = pneg %p592
      $region50: #{tpu_custom_call.1} parent=5 // pred_check_branch
        %595 = sbr.rel (%p593) target = $region52
      $region51: #{tpu_custom_call.1} parent=5 // pred_region
        %s596 = ssub.s32 %s14, 2
        // Predicated region
        $region53: #{tpu_custom_call.1} parent=51 // pred_check
          %p597 = pneg %p111
        $region54: #{tpu_custom_call.1} parent=51 // pred_check_branch
          %599 = sbr.rel (%p597) target = $region56
        $region55: #{tpu_custom_call.1} parent=51 // pred_region
          %s600 = sand.u32 %s96, 1
          %s601 = scalar_lea.sflag [#allocation4], %s600
          %s602 = sand.u32 %s96, 1
          %s603 = smul.addr %s602, 32
          %s604 = scalar_lea.vmem [#allocation8], %s603
          %605 = dma.done %s601, 512
        $region56: #{tpu_custom_call.1} parent=51 // pred_fallthru
          _
      $region52: #{tpu_custom_call.1} parent=5 // pred_fallthru
        _
    $region6: #{tpu_custom_call.1} parent=1 // loop_footer
      %s18 = sadd.s32 1, %s14
    $region7: #{tpu_custom_call.1} parent=1 // loop_footer_branch
      %13 = sbr.rel target = $region3
    $region8: #{tpu_custom_call.1} parent=1 // loop_exit
      _
    %606 = vsyncpa [#allocation3], 1
    %s607 = scalar_lea.sflag [#allocation3], 1
    %608 = vsyncpa %s607, 1
    %609 = vsyncpa [#allocation6], 1
    %610 = vsyncpa [#allocation4], 1
    %s611 = scalar_lea.sflag [#allocation4], 1
    %612 = vsyncpa %s611, 1

</llo_original>
